<compile_context>
chip_gen: v5e
topology: v5e:2x2
jax: 0.10.0
libtpu: 0.0.40
codegen_flags: <defaults>
</compile_context>

<pallas_src>
import functools
import math

import jax
import jax.numpy as jnp
from jax.experimental import pallas as pl
from jax.experimental.pallas import tpu as pltpu


# ---------------------------------------------------------------------------
# Kernel body
# ---------------------------------------------------------------------------
def _gen_sigmoid_kernel(x_ref, beta_ref, bias_ref, o_ref, *,
                        nonlin, compute_dtype, approx_recip):
    x = x_ref[...].astype(compute_dtype)
    beta = beta_ref[...].astype(compute_dtype)   # (1, C) -> broadcasts over rows
    bias = bias_ref[...].astype(compute_dtype)   # (1, C)
    if nonlin == "logsigm":
        z = jnp.log1p(x) * beta + bias
    else:  # "sigm"
        z = x * beta + bias
    # sigmoid(z) = 1 / (1 + exp(-z)); exp + reciprocal both run on the EUP slot.
    one = jnp.asarray(1.0, dtype=compute_dtype)
    y = pl.reciprocal(one + jnp.exp(-z), approx=approx_recip)
    o_ref[...] = y.astype(o_ref.dtype)


# ---------------------------------------------------------------------------
# Wrapper helpers
# ---------------------------------------------------------------------------
def _vmem_capacity_bytes():
    """Physical VMEM per TensorCore; conservative (v7x) fallback off-TPU."""
    try:
        return int(pltpu.get_tpu_info().vmem_capacity_bytes)
    except Exception:
        return 64 * 1024 * 1024


def _lane_densify(x, beta, bias):
    """Fold rows into lanes so the last dim is a multiple of 128.

    Returns (x', beta', bias', densified: bool).  Pure layout plumbing in the
    wrapper; the kernel math is unchanged.
    """
    n, d = x.shape
    if d % 128 == 0:
        return x, beta, bias, False
    k = 128 // math.gcd(d, 128)            # rows folded per dense row; (k*d) % 128 == 0
    d_aligned = pl.cdiv(d, 128) * 128
    waste = 1.0 - d / d_aligned            # masked-lane fraction without densify
    pad = (-n) % k
    # Free reshape (pad == 0): densify unless the layout is already ~dense.
    # Padding costs roughly one extra pass over x and out, so only pay it when
    # more than half of the store lanes would otherwise be masked.
    threshold = 0.10 if pad == 0 else 0.50
    if waste <= threshold:
        return x, beta, bias, False
    if pad:
        x = jnp.pad(x, ((0, pad), (0, 0)))  # zero rows; results sliced off later
    x2 = x.reshape((n + pad) // k, k * d)
    return x2, jnp.tile(beta, (1, k)), jnp.tile(bias, (1, k)), True


def _tile_policy(n, d, itemsize, block_rows, block_cols, budget):
    pack = max(8, 32 // itemsize)           # sublane packing: 8 f32, 16 bf16, 32 int8

    # ---- column tile: prefer the full row -----------------------------------
    if block_cols is None:
        if d <= 128 or 4 * pack * d * itemsize <= budget:
            block_cols = d
        else:
            block_cols = (budget // (4 * pack * itemsize) // 128) * 128
            block_cols = max(128, min(block_cols, d))
    else:
        block_cols = min(int(block_cols), d)          # clamp oversized request
        if block_cols != d:
            block_cols = max(128, (block_cols // 128) * 128)
            if block_cols > d or d < 128:
                block_cols = d

    # ---- row tile: fill the double-buffered budget (2 x-bufs + 2 out-bufs) --
    max_rows = budget // (4 * block_cols * itemsize)
    max_rows = max(pack, (max_rows // pack) * pack)
    if block_rows is None:
        block_rows = min(n, max_rows)
    else:
        block_rows = min(int(block_rows), n, max_rows)
    if block_rows < n:
        block_rows = max(pack, (block_rows // pack) * pack)

    grid_cols = pl.cdiv(d, block_cols)
    grid_rows = pl.cdiv(n, block_rows)

    # ---- make sure a mid-sized input yields >=2 parallel steps so both v7x
    # TensorCores get work (cheap ~0.35 us extra on single-TC parts) ----------
    if grid_cols * grid_rows == 1 and n >= 2 * pack:
        target = min(4, n // pack)
        block_rows = pl.cdiv(pl.cdiv(n, target), pack) * pack
        grid_rows = pl.cdiv(n, block_rows)

    return block_rows, block_cols, grid_rows, grid_cols


# ---------------------------------------------------------------------------
# Public entry point
# ---------------------------------------------------------------------------
def generalized_sigmoid(x, beta, bias, *, nonlin="logsigm",
                        block_rows=None, block_cols=None,
                        compute_dtype=jnp.float32, approx_recip=False):
    """Pallas implementation of GeneralizedSigmoid.forward.

    x: (N, D), beta: (1, D), bias: (1, D).
    """
    # Identity path: do not pay a full HBM read+write through a copy kernel.
    if nonlin is None:
        return x
    assert nonlin in ("logsigm", "sigm"), f"unknown nonlin {nonlin!r}"

    n0, d0 = x.shape
    assert beta.shape == (1, d0) and bias.shape == (1, d0)

    # Lane-dense layout (wrapper-side plumbing only).
    x, beta, bias, densified = _lane_densify(x, beta, bias)
    n, d = x.shape
    itemsize = jnp.dtype(x.dtype).itemsize

    vmem_cap = _vmem_capacity_bytes()
    budget = min(vmem_cap // 2, 64 * 1024 * 1024)    # double-buffer tile budget

    block_rows, block_cols, grid_rows, grid_cols = _tile_policy(
        n, d, itemsize, block_rows, block_cols, budget)

    tile_bytes = block_rows * block_cols * itemsize
    param_bytes = 2 * 2 * block_cols * itemsize      # beta + bias, double buffered
    needed = 4 * tile_bytes + param_bytes + (2 << 20)
    vmem_limit = int(min(vmem_cap - (8 << 20), max(32 << 20, needed)))

    elems = n * d
    cost = pl.CostEstimate(
        flops=3 * elems,
        transcendentals=(3 if nonlin == "logsigm" else 2) * elems,
        bytes_accessed=(2 * elems + 4 * d) * itemsize,
    )

    kernel = functools.partial(_gen_sigmoid_kernel, nonlin=nonlin,
                               compute_dtype=compute_dtype,
                               approx_recip=approx_recip)

    # TODO(synk): if a shape ever falls through to the masked-store path with
    # tiny tiles, pipeline_mode=pl.Buffered(3) on the x spec would hide the
    # exposed DMA latency; not needed for the densified common case.
    out = pl.pallas_call(
        kernel,
        out_shape=jax.ShapeDtypeStruct((n, d), x.dtype),
        grid_spec=pltpu.PrefetchScalarGridSpec(
            num_scalar_prefetch=0,
            # Column index is the OUTER (slowest) grid axis: beta/bias block
            # indices are constant while sweeping rows, so their DMAs are not
            # re-issued every step.
            grid=(grid_cols, grid_rows),
            in_specs=[
                pl.BlockSpec((block_rows, block_cols), lambda j, i: (i, j)),
                pl.BlockSpec((1, block_cols), lambda j, i: (0, j)),
                pl.BlockSpec((1, block_cols), lambda j, i: (0, j)),
            ],
            out_specs=pl.BlockSpec((block_rows, block_cols),
                                   lambda j, i: (i, j)),
        ),
        compiler_params=pltpu.CompilerParams(
            dimension_semantics=("parallel", "parallel"),
            vmem_limit_bytes=vmem_limit,
        ),
        cost_estimate=cost,
    )(x, beta, bias)

    if densified:
        out = out.reshape(-1, d0)[:n0]
    return out


# ---------------------------------------------------------------------------
# Reference + self-test
# ---------------------------------------------------------------------------
def reference(x, beta, bias, nonlin):
    if nonlin == "logsigm":
        return jax.nn.sigmoid(jnp.log1p(x) * beta + bias)
    if nonlin == "sigm":
        return jax.nn.sigmoid(x * beta + bias)
    return x


if __name__ == "__main__":
    keys = jax.random.split(jax.random.PRNGKey(0), 9)
    ok = True

    def run_case(name, x, beta, bias, nonlin, **kw):
        out = jax.block_until_ready(
            generalized_sigmoid(x, beta, bias, nonlin=nonlin, **kw))
        ref = reference(x, beta, bias, nonlin)
        good = (out.shape == ref.shape and
                bool(jnp.allclose(out, ref, atol=1e-5, rtol=1e-5)))
        if not good:
            print(f"MISMATCH: {name}")
        return good

    # Case 1: module-like shape; small covariate dim that does NOT divide 128
    # (exercises the generalized lane-densify + row padding path).
    batch, dim = 8, 10
    x1 = jax.random.uniform(keys[0], (batch, dim), jnp.float32, 0.0, 5.0)
    beta1 = jnp.ones((1, dim), jnp.float32) + 0.1 * jax.random.normal(keys[1], (1, dim))
    bias1 = 0.1 * jax.random.normal(keys[2], (1, dim), jnp.float32)
    for nonlin in ("logsigm", "sigm", None):
        ok &= run_case(f"d=10 nonlin={nonlin}", x1, beta1, bias1, nonlin)

    # Case 2: dim divides 128 -> copy-free densify (64,32) -> (16,128).
    n2, d2 = 64, 32
    x2 = jax.random.uniform(keys[3], (n2, d2), jnp.float32, 0.0, 5.0)
    beta2 = jnp.ones((1, d2), jnp.float32) + 0.1 * jax.random.normal(keys[4], (1, d2))
    bias2 = 0.1 * jax.random.normal(keys[5], (1, d2), jnp.float32)
    ok &= run_case("d=32 logsigm", x2, beta2, bias2, "logsigm")
    ok &= run_case("d=32 sigm", x2, beta2, bias2, "sigm")

    # Case 3: lane-aligned dim, exercises the real 2-D tiled grid (manual and
    # automatic tiling), with columns as the slowest grid axis.
    n3, d3 = 256, 384
    x3 = jax.random.uniform(keys[6], (n3, d3), jnp.float32, 0.0, 5.0)
    beta3 = jnp.ones((1, d3), jnp.float32) + 0.1 * jax.random.normal(keys[7], (1, d3))
    bias3 = 0.1 * jax.random.normal(keys[8], (1, d3), jnp.float32)
    ok &= run_case("d=384 manual tiles", x3, beta3, bias3, "logsigm",
                   block_rows=64, block_cols=128)
    ok &= run_case("d=384 auto tiles", x3, beta3, bias3, "logsigm")

    if ok:
        print("KERNEL_OK")
</pallas_src>

<mosaic_0001>
module attributes {stable_mosaic.version = 11 : i64} {
  func.func @_gen_sigmoid_kernel(%arg0: i32, %arg1: i32, %arg2: memref<1x640xf32, #tpu.memory_space<vmem>>, %arg3: memref<1x640xf32, #tpu.memory_space<vmem>>, %arg4: memref<1x640xf32, #tpu.memory_space<vmem>>, %arg5: memref<1x640xf32, #tpu.memory_space<vmem>>) attributes {dimension_semantics = [#tpu.dimension_semantics<parallel>, #tpu.dimension_semantics<parallel>], iteration_bounds = array<i64: 1, 1>, scalar_prefetch = 0 : i64, scratch_operands = 0 : i64, tpu.core_type = #tpu.core_type<tc>, window_params = [{transform_indices = @transform_0, window_bounds = array<i64: 1, 640>}, {transform_indices = @transform_1, window_bounds = array<i64: 1, 640>}, {transform_indices = @transform_2, window_bounds = array<i64: 1, 640>}, {transform_indices = @transform_3, window_bounds = array<i64: 1, 640>}]} {
    %c0 = arith.constant 0 : index
    %c0_0 = arith.constant 0 : index
    %0 = vector.load %arg2[%c0, %c0_0] : memref<1x640xf32, #tpu.memory_space<vmem>>, vector<1x640xf32>
    %c0_1 = arith.constant 0 : index
    %c0_2 = arith.constant 0 : index
    %1 = vector.load %arg3[%c0_1, %c0_2] : memref<1x640xf32, #tpu.memory_space<vmem>>, vector<1x640xf32>
    %c0_3 = arith.constant 0 : index
    %c0_4 = arith.constant 0 : index
    %2 = vector.load %arg4[%c0_3, %c0_4] : memref<1x640xf32, #tpu.memory_space<vmem>>, vector<1x640xf32>
    %3 = math.log1p %0 : vector<1x640xf32>
    %4 = arith.mulf %3, %1 : vector<1x640xf32>
    %5 = arith.addf %4, %2 : vector<1x640xf32>
    %cst = arith.constant 0.000000e+00 : f32
    %6 = vector.broadcast %cst : f32 to vector<1x640xf32>
    %7 = arith.subf %6, %5 : vector<1x640xf32>
    %8 = math.exp %7 : vector<1x640xf32>
    %cst_5 = arith.constant 1.000000e+00 : f32
    %9 = vector.broadcast %cst_5 : f32 to vector<1x640xf32>
    %10 = arith.addf %9, %8 : vector<1x640xf32>
    %11 = tpu.reciprocal %10 : vector<1x640xf32> -> vector<1x640xf32>
    %c0_6 = arith.constant 0 : index
    %c0_7 = arith.constant 0 : index
    %12 = vector.load %arg5[%c0_6, %c0_7] : memref<1x640xf32, #tpu.memory_space<vmem>>, vector<1x640xf32>
    tpu.vector_store %arg5[%c0_6, %c0_7], %11 {strides = array<i32>} : memref<1x640xf32, #tpu.memory_space<vmem>>, vector<1x640xf32>,
    return
  }
  func.func @transform_0(%arg0: i32, %arg1: i32) -> (i32, i32) {
    %c0_i32 = arith.constant 0 : i32
    return %arg1, %arg0 : i32, i32
  }
  func.func @transform_1(%arg0: i32, %arg1: i32) -> (i32, i32) {
    %c0_i32 = arith.constant 0 : i32
    %c0_i32_0 = arith.constant 0 : i32
    return %c0_i32, %arg0 : i32, i32
  }
  func.func @transform_2(%arg0: i32, %arg1: i32) -> (i32, i32) {
    %c0_i32 = arith.constant 0 : i32
    %c0_i32_0 = arith.constant 0 : i32
    return %c0_i32, %arg0 : i32, i32
  }
  func.func @transform_3(%arg0: i32, %arg1: i32) -> (i32, i32) {
    %c0_i32 = arith.constant 0 : i32
    return %arg1, %arg0 : i32, i32
  }
}

</mosaic_0001>

<llo_original>
// kernel: tpu_custom_call.1
$region0: #{tpu_custom_call.1}
  #allocation0 [shape = 'u32[]', space=smem, size = 0x4, offset = 0x4, fixed_abs, tag = 'smem constant byte address 0x4 - core index']
  #allocation1 [shape = 'u32[72,128]{1,0:T(1,128)}', space=vmem, size = 0x9000, scoped, tag = 'internal scratch']
  %s0 = inlined_call_operand.hbm [shape: f32[1,640], index: 0, kind: input, shape index: {}]
  %s1 = inlined_call_operand.hbm [shape: f32[1,640], index: 1, kind: input, shape index: {}]
  %s2 = inlined_call_operand.hbm [shape: f32[1,640], index: 2, kind: input, shape index: {}]
  %s3 = inlined_call_operand.hbm [shape: f32[1,640], index: 3, kind: output, shape index: {}]
  %s4 = sld [smem:[#allocation0]]
  $region34: #{tpu_custom_call.1} parent=0
    _
  %s6 = ssub.s32 1, %s4
  %s7 = scalar_select 0, %s6, %s4
  $region1: #{tpu_custom_call.1} parent=0
    #allocation2 [shape = 'u8[2560]{0}', space=vmem, size = 0xc00, scoped, tag = 'input window, operand 0, single buffered']
    #allocation3 [shape = 's32[1]{0}', space=sflag, size = 0x4, scoped, tag = 'scoped memory for tpu_custom_call.1']
    #allocation4 [shape = 's32[1]{0}', space=sflag, size = 0x4, scoped, tag = 'scoped memory for tpu_custom_call.1']
    #allocation5 [shape = 'u8[2560]{0}', space=vmem, size = 0xc00, scoped, tag = 'input window, operand 1, single buffered']
    #allocation6 [shape = 's32[1]{0}', space=sflag, size = 0x4, scoped, tag = 'scoped memory for tpu_custom_call.1']
    #allocation7 [shape = 'u8[2560]{0}', space=vmem, size = 0xc00, scoped, tag = 'input window, operand 2, single buffered']
    #allocation8 [shape = 'u8[2560]{0}', space=vmem, size = 0xc00, scoped, tag = 'output window, operand 0, single buffered']
    %8 = vsyncpa [#allocation3], 0
    %9 = vsyncpa [#allocation6], 0
    %10 = vsyncpa [#allocation4], 0
    // Predicated region
    $region2: #{tpu_custom_call.1} parent=1 // pred_check
      _
    $region3: #{tpu_custom_call.1} parent=1 // pred_check_branch
      %12 = sbr.rel (0) target = $region5
    $region4: #{tpu_custom_call.1} parent=1 // pred_region
      %14 = vsyncadd [#allocation3], 0
      %s16 = sshll.u32 %s0, 4
      %s17 = int_to_ptr.hbm [resolvable:$true] %s16
      %s18 = sshll.u32 [#allocation2], 4
      %s19 = int_to_ptr.vmem [resolvable:$true] %s18
      %21 = dma.hbm_to_vmem [thread:$0]  %s17, 80, %s19, [#allocation3]
    $region5: #{tpu_custom_call.1} parent=1 // pred_fallthru
      _
    // Predicated region
    $region6: #{tpu_custom_call.1} parent=1 // pred_check
      _
    $region7: #{tpu_custom_call.1} parent=1 // pred_check_branch
      %23 = sbr.rel (0) target = $region9
    $region8: #{tpu_custom_call.1} parent=1 // pred_region
      %25 = vsyncadd [#allocation6], 0
      %s27 = sshll.u32 %s1, 4
      %s28 = int_to_ptr.hbm [resolvable:$true] %s27
      %s29 = sshll.u32 [#allocation5], 4
      %s30 = int_to_ptr.vmem [resolvable:$true] %s29
      %32 = dma.hbm_to_vmem [thread:$0]  %s28, 80, %s30, [#allocation6]
    $region9: #{tpu_custom_call.1} parent=1 // pred_fallthru
      _
    // Predicated region
    $region10: #{tpu_custom_call.1} parent=1 // pred_check
      _
    $region11: #{tpu_custom_call.1} parent=1 // pred_check_branch
      %34 = sbr.rel (0) target = $region13
    $region12: #{tpu_custom_call.1} parent=1 // pred_region
      %36 = vsyncadd [#allocation6], 0
      %s38 = sshll.u32 %s2, 4
      %s39 = int_to_ptr.hbm [resolvable:$true] %s38
      %s40 = sshll.u32 [#allocation7], 4
      %s41 = int_to_ptr.vmem [resolvable:$true] %s40
      %43 = dma.hbm_to_vmem [thread:$0]  %s39, 80, %s41, [#allocation6]
    $region13: #{tpu_custom_call.1} parent=1 // pred_fallthru
      _
    // Predicated region
    $region14: #{tpu_custom_call.1} parent=1 // pred_check
      _
    $region15: #{tpu_custom_call.1} parent=1 // pred_check_branch
      %45 = sbr.rel (0) target = $region17
    $region16: #{tpu_custom_call.1} parent=1 // pred_region
      %47 = dma.done [#allocation3], 80
    $region17: #{tpu_custom_call.1} parent=1 // pred_fallthru
      _
    // Predicated region
    $region18: #{tpu_custom_call.1} parent=1 // pred_check
      _
    $region19: #{tpu_custom_call.1} parent=1 // pred_check_branch
      %49 = sbr.rel (0) target = $region21
    $region20: #{tpu_custom_call.1} parent=1 // pred_region
      %51 = dma.done [#allocation6], 80
    $region21: #{tpu_custom_call.1} parent=1 // pred_fallthru
      _
    // Predicated region
    $region22: #{tpu_custom_call.1} parent=1 // pred_check
      _
    $region23: #{tpu_custom_call.1} parent=1 // pred_check_branch
      %53 = sbr.rel (0) target = $region25
    $region24: #{tpu_custom_call.1} parent=1 // pred_region
      %55 = dma.done [#allocation6], 80
    $region25: #{tpu_custom_call.1} parent=1 // pred_fallthru
      _
    %v56 = vld [vmem:[#allocation2] sm:$0x1f]
    %v57 = vld [vmem:[#allocation5] sm:$0x1f]
    %v58 = vld [vmem:[#allocation7] sm:$0x1f]
    %v59 = vadd.f32 %v56, 1.0
    %v60 = vlog2.pop %v59
    %v61 = vmul.f32 %v60, 0.6931472
    %v62 = vmul.f32 -0.5, %v56
    %v63 = vadd.f32 %v62, 1.0
    %v64 = vmul.f32 %v63, %v56
    %v65 = vand.u32 2147483647, %v56
    %vm66 = vcmp.lt.f32.partialorder %v65, 0.0004427343
    %v67 = vsel %vm66, %v64, %v61
    %v68 = vmul.f32 %v67, %v57
    %v69 = vadd.f32 %v68, %v58
    %v70 = vsub.f32 0.0, %v69
    %v71 = vmul.f32 %v70, 1.442695
    %v72 = vpow.pop %v71
    %v73 = vadd.f32 %v72, 1.0
    %v74 = vrcp.pop %v73
    %v75 = vmul.f32 %v73, %v74
    %v76 = vsub.f32 1.0, %v75
    %v77 = vmul.f32 %v74, %v76
    %v78 = vadd.f32 %v74, %v77
    %vm79 = vweird.f32 %v73
    %vm80 = vweird.f32 %v74
    %vm81 = vmor %vm79, %vm80
    %v82 = vsel %vm81, %v74, %v78
    %v83 = vand.u32 2147483647, %v73
    %vm84 = vcmp.eq.f32.partialorder %v83, 8.507059e+37
    %v85 = vand.u32 %v73, 2147483648
    %v86 = vor.u32 1.1754944e-38, %v85
    %v87 = vsel %vm84, %v86, %v82
    %v88 = vlaneseq
    %vm89 = vcmp.ge.s32.totalorder %v88, 0
    %vm90 = vcmp.lt.s32.totalorder %v88, 640
    %vm91 = vmand %vm89, %vm90
    %92 = vst.msk [vmem:[#allocation8] sm:$0x1f] %vm91, %v87
    // Predicated region
    $region26: #{tpu_custom_call.1} parent=1 // pred_check
      _
    $region27: #{tpu_custom_call.1} parent=1 // pred_check_branch
      %94 = sbr.rel (0) target = $region29
    $region28: #{tpu_custom_call.1} parent=1 // pred_region
      %96 = vsyncadd [#allocation4], 0
      %s98 = sshll.u32 [#allocation8], 4
      %s99 = int_to_ptr.vmem [resolvable:$true] %s98
      %s100 = sshll.u32 %s3, 4
      %s101 = int_to_ptr.hbm [resolvable:$true] %s100
      %103 = dma.vmem_to_hbm [thread:$0]  %s99, 80, %s101, [#allocation4]
    $region29: #{tpu_custom_call.1} parent=1 // pred_fallthru
      _
    // Predicated region
    $region30: #{tpu_custom_call.1} parent=1 // pred_check
      _
    $region31: #{tpu_custom_call.1} parent=1 // pred_check_branch
      %105 = sbr.rel (0) target = $region33
    $region32: #{tpu_custom_call.1} parent=1 // pred_region
      %107 = dma.done [#allocation4], 80
    $region33: #{tpu_custom_call.1} parent=1 // pred_fallthru
      _
    %108 = vsyncpa [#allocation3], 1
    %109 = vsyncpa [#allocation6], 1
    %110 = vsyncpa [#allocation4], 1

</llo_original>
